<compile_context>
chip_gen: v5e
topology: v5e:2x2
jax: 0.10.0
libtpu: 0.0.40
codegen_flags: <defaults>
</compile_context>

<pallas_src>
import jax
import jax.numpy as jnp
from jax.experimental import pallas as pl
from jax.experimental.pallas import tpu as pltpu


def _logits_kernel(x_ref, w_ref, b_ref, o_ref, acc_ref):
    # Grid: (j over N/class tiles [parallel], k over D/reduction tiles [arbitrary]).
    # x_ref:   (Bp, tk)  activations (original dtype, cast in-kernel)
    # w_ref:   (tk, tn)  bf16 weights
    # b_ref:   (1,  tn)  fp32 bias
    # o_ref:   (Bp, tn)  fp32 logits tile
    # acc_ref: (Bp, tn)  fp32 accumulator (scratch, resident across k)
    k = pl.program_id(1)

    @pl.when(k == 0)
    def _():
        acc_ref[...] = jnp.zeros_like(acc_ref)

    # bf16 x bf16 -> fp32 accumulation on the MXU.
    acc_ref[...] += jnp.dot(
        x_ref[...].astype(jnp.bfloat16),
        w_ref[...].astype(jnp.bfloat16),
        preferred_element_type=jnp.float32,
    )

    @pl.when(k == pl.num_programs(1) - 1)
    def _():
        o_ref[...] = (acc_ref[...] + b_ref[...].astype(jnp.float32)).astype(o_ref.dtype)


def _pick_tile(dim, preferred, granule=128):
    """Largest tile <= preferred that is a multiple of `granule` and divides `dim`.

    Falls back to the full extent (always a legal BlockSpec) when `dim` is not
    a multiple of `granule`.
    """
    if dim % granule != 0:
        return dim
    t = min(preferred, dim)
    t -= t % granule
    while t > granule and dim % t != 0:
        t -= granule
    return t if dim % t == 0 else dim


def _logits_pallas(x2d, weight, bias, tk, tn):
    Bp, D = x2d.shape
    K = weight.shape[1]
    grid = (K // tn, D // tk)

    cost = pl.CostEstimate(
        flops=2 * Bp * D * K,
        transcendentals=0,
        bytes_accessed=(Bp * D * x2d.dtype.itemsize
                        + D * K * weight.dtype.itemsize
                        + K * bias.dtype.itemsize
                        + Bp * K * 4),
    )

    return pl.pallas_call(
        _logits_kernel,
        out_shape=jax.ShapeDtypeStruct((Bp, K), jnp.float32),
        grid_spec=pltpu.PrefetchScalarGridSpec(
            num_scalar_prefetch=0,
            grid=grid,
            in_specs=[
                pl.BlockSpec((Bp, tk), lambda j, k: (0, k)),   # activations
                pl.BlockSpec((tk, tn), lambda j, k: (k, j)),   # bf16 weights
                pl.BlockSpec((1, tn), lambda j, k: (0, j)),    # bias
            ],
            out_specs=pl.BlockSpec((Bp, tn), lambda j, k: (0, j)),
            scratch_shapes=[pltpu.VMEM((Bp, tn), jnp.float32)],
        ),
        compiler_params=pltpu.CompilerParams(
            dimension_semantics=("parallel", "arbitrary"),
            vmem_limit_bytes=32 * 1024 * 1024,   # safe on v7x's 64 MiB VMEM
        ),
        cost_estimate=cost,
    )(x2d, weight, bias)


def get_logits(inputs_nchw, weight, bias, *, tk_pref=512, tn_pref=512):
    """Pallas equivalent of Attack_Base.get_logits(inputs) -> model(inputs).logits."""
    B = inputs_nchw.shape[0]
    D, K = weight.shape

    # Flatten NCHW -> (B, D). Reshape is free; no astype here (dtype cast
    # happens inside the kernel to avoid an extra HBM pass over activations).
    x2d = inputs_nchw.reshape(B, D)

    # Pad batch to a sublane multiple (>=8) so the M block satisfies (8,128)
    # tiling; padded rows are zeros and sliced off after the kernel.
    # (For real attack workloads, batch many perturbed candidates here so the
    #  M tile reaches >=128/256 and the MXU is actually fed.)
    Bp = ((B + 7) // 8) * 8
    if Bp != B:
        x2d = jnp.pad(x2d, ((0, Bp - B), (0, 0)))

    tk = _pick_tile(D, tk_pref)   # reduction tile
    tn = _pick_tile(K, tn_pref)   # output/class tile

    out = _logits_pallas(x2d, weight, bias, tk, tn)
    return out[:B]


class AttackBasePallas:
    """JAX/Pallas port of Attack_Base: holds a (synthetic) model, exposes get_logits."""

    def __init__(self, in_shape=(4, 16, 16), num_classes=128, key=None):
        C, H, W = in_shape
        D = C * H * W
        if key is None:
            key = jax.random.PRNGKey(42)
        kw, kb = jax.random.split(key)
        # Synthetic linear classifier head. Weights stored in bf16: halves HBM
        # traffic on this bandwidth-bound GEMM and is MXU-native on v6e/v7x.
        self.weight = (jax.random.normal(kw, (D, num_classes), jnp.float32)
                       * (1.0 / jnp.sqrt(D))).astype(jnp.bfloat16)
        self.bias = jax.random.normal(kb, (1, num_classes), jnp.float32) * 0.01

    def get_logits(self, inputs, labels=None, *args, **kwargs):
        return get_logits(inputs, self.weight, self.bias)

    def forward(self, inputs, labels=None, *args):
        # Empty in the base wrapper; concrete attack methods override this.
        raise NotImplementedError

    # TODO(synk): `save()` (dumping adversarial examples from a DataLoader) is
    # host-side I/O with no Pallas equivalent; intentionally not implemented.


if __name__ == "__main__":
    key = jax.random.PRNGKey(0)
    B, C, H, W = 2, 4, 16, 16
    x = jax.random.normal(key, (B, C, H, W), jnp.float32)

    atk = AttackBasePallas(in_shape=(C, H, W), num_classes=128,
                           key=jax.random.PRNGKey(42))

    logits = atk.get_logits(x)
    jax.block_until_ready(logits)

    # Cross-check against a plain-JAX reference of the same synthetic model
    # (same bf16 weights, fp32 accumulation).
    x2d_ref = x.reshape(B, -1).astype(jnp.bfloat16)
    ref = jnp.dot(x2d_ref, atk.weight, preferred_element_type=jnp.float32) + atk.bias

    assert logits.shape == (B, 128)
    assert logits.dtype == jnp.float32
    assert jnp.allclose(logits, ref, atol=5e-3, rtol=5e-3), \
        float(jnp.max(jnp.abs(logits - ref)))

    print("KERNEL_OK")
</pallas_src>

<mosaic_0001>
module attributes {stable_mosaic.version = 11 : i64} {
  func.func @_logits_kernel(%arg0: i32, %arg1: i32, %arg2: memref<8x512xf32, #tpu.memory_space<vmem>>, %arg3: memref<512x128xbf16, #tpu.memory_space<vmem>>, %arg4: memref<1x128xf32, #tpu.memory_space<vmem>>, %arg5: memref<8x128xf32, #tpu.memory_space<vmem>>, %arg6: memref<8x128xf32, #tpu.memory_space<vmem>>) attributes {dimension_semantics = [#tpu.dimension_semantics<parallel>, #tpu.dimension_semantics<arbitrary>], iteration_bounds = array<i64: 1, 2>, scalar_prefetch = 0 : i64, scratch_operands = 1 : i64, tpu.core_type = #tpu.core_type<tc>, window_params = [{transform_indices = @transform_0, window_bounds = array<i64: 8, 512>}, {transform_indices = @transform_1, window_bounds = array<i64: 512, 128>}, {transform_indices = @transform_2, window_bounds = array<i64: 1, 128>}, {transform_indices = @transform_3, window_bounds = array<i64: 8, 128>}]} {
    %c0_i32 = arith.constant 0 : i32
    %0 = arith.cmpi eq, %arg1, %c0_i32 : i32
    %1 = arith.extui %0 : i1 to i32
    %c0_i32_0 = arith.constant 0 : i32
    %2 = arith.cmpi ne, %1, %c0_i32_0 : i32
    scf.if %2 {
      %cst_9 = arith.constant 0.000000e+00 : f32
      %13 = vector.broadcast %cst_9 : f32 to vector<8x128xf32>
      %c0_10 = arith.constant 0 : index
      %c0_11 = arith.constant 0 : index
      %14 = vector.load %arg6[%c0_10, %c0_11] : memref<8x128xf32, #tpu.memory_space<vmem>>, vector<8x128xf32>
      tpu.vector_store %arg6[%c0_10, %c0_11], %13 {strides = array<i32>} : memref<8x128xf32, #tpu.memory_space<vmem>>, vector<8x128xf32>,
    } else {
    }
    %c0 = arith.constant 0 : index
    %c0_1 = arith.constant 0 : index
    %3 = vector.load %arg6[%c0, %c0_1] : memref<8x128xf32, #tpu.memory_space<vmem>>, vector<8x128xf32>
    %c0_2 = arith.constant 0 : index
    %c0_3 = arith.constant 0 : index
    %4 = vector.load %arg2[%c0_2, %c0_3] : memref<8x512xf32, #tpu.memory_space<vmem>>, vector<8x512xf32>
    %5 = arith.truncf %4 : vector<8x512xf32> to vector<8x512xbf16>
    %c0_4 = arith.constant 0 : index
    %c0_5 = arith.constant 0 : index
    %6 = vector.load %arg3[%c0_4, %c0_5] : memref<512x128xbf16, #tpu.memory_space<vmem>>, vector<512x128xbf16>
    %cst = arith.constant dense<0.000000e+00> : vector<8x128xf32>
    %7 = tpu.matmul %5, %6, %cst {dimension_numbers = #tpu.dot_dimension_numbers<[1], [0], [0], [1], [0, 0, 1, 1], [], []>} : vector<8x512xbf16>, vector<512x128xbf16>, vector<8x128xf32> -> vector<8x128xf32>
    %8 = arith.addf %3, %7 : vector<8x128xf32>
    %c0_6 = arith.constant 0 : index
    %c0_7 = arith.constant 0 : index
    %9 = vector.load %arg6[%c0_6, %c0_7] : memref<8x128xf32, #tpu.memory_space<vmem>>, vector<8x128xf32>
    tpu.vector_store %arg6[%c0_6, %c0_7], %8 {strides = array<i32>} : memref<8x128xf32, #tpu.memory_space<vmem>>, vector<8x128xf32>,
    %c1_i32 = arith.constant 1 : i32
    %10 = arith.cmpi eq, %arg1, %c1_i32 : i32
    %11 = arith.extui %10 : i1 to i32
    %c0_i32_8 = arith.constant 0 : i32
    %12 = arith.cmpi ne, %11, %c0_i32_8 : i32
    scf.if %12 {
      %c0_9 = arith.constant 0 : index
      %c0_10 = arith.constant 0 : index
      %13 = vector.load %arg6[%c0_9, %c0_10] : memref<8x128xf32, #tpu.memory_space<vmem>>, vector<8x128xf32>
      %c0_11 = arith.constant 0 : index
      %c0_12 = arith.constant 0 : index
      %14 = vector.load %arg4[%c0_11, %c0_12] : memref<1x128xf32, #tpu.memory_space<vmem>>, vector<1x128xf32>
      %15 = vector.broadcast %14 : vector<1x128xf32> to vector<8x128xf32>
      %16 = arith.addf %13, %15 : vector<8x128xf32>
      %c0_13 = arith.constant 0 : index
      %c0_14 = arith.constant 0 : index
      %17 = vector.load %arg5[%c0_13, %c0_14] : memref<8x128xf32, #tpu.memory_space<vmem>>, vector<8x128xf32>
      tpu.vector_store %arg5[%c0_13, %c0_14], %16 {strides = array<i32>} : memref<8x128xf32, #tpu.memory_space<vmem>>, vector<8x128xf32>,
    } else {
    }
    return
  }
  func.func @transform_0(%arg0: i32, %arg1: i32) -> (i32, i32) {
    %c0_i32 = arith.constant 0 : i32
    %c0_i32_0 = arith.constant 0 : i32
    return %c0_i32, %arg1 : i32, i32
  }
  func.func @transform_1(%arg0: i32, %arg1: i32) -> (i32, i32) {
    %c0_i32 = arith.constant 0 : i32
    return %arg1, %arg0 : i32, i32
  }
  func.func @transform_2(%arg0: i32, %arg1: i32) -> (i32, i32) {
    %c0_i32 = arith.constant 0 : i32
    %c0_i32_0 = arith.constant 0 : i32
    return %c0_i32, %arg0 : i32, i32
  }
  func.func @transform_3(%arg0: i32, %arg1: i32) -> (i32, i32) {
    %c0_i32 = arith.constant 0 : i32
    %c0_i32_0 = arith.constant 0 : i32
    return %c0_i32, %arg0 : i32, i32
  }
}

</mosaic_0001>

<llo_original>
// kernel: tpu_custom_call.1
$region0: #{tpu_custom_call.1}
  #allocation0 [shape = 'u32[]', space=smem, size = 0x4, offset = 0x4, fixed_abs, tag = 'smem constant byte address 0x4 - core index']
  #allocation1 [shape = 'u32[72,128]{1,0:T(1,128)}', space=vmem, size = 0x9000, scoped, tag = 'internal scratch']
  #allocation2 [shape = 'f32[8,128]{1,0:T(8,128)}', space=vmem, size = 0x1000, scoped, tag = 'scratch operand']
  %s0 = inlined_call_operand.hbm [shape: f32[8,1024], index: 0, kind: input, shape index: {}]
  %s1 = inlined_call_operand.hbm [shape: bf16[1024,128], index: 1, kind: input, shape index: {}]
  %s2 = inlined_call_operand.vmem [shape: f32[1,128], index: 2, kind: input, shape index: {}]
  %s3 = inlined_call_operand.hbm [shape: f32[8,128], index: 3, kind: output, shape index: {}]
  %s4 = sld [smem:[#allocation0]]
  $region61: #{tpu_custom_call.1} parent=0
    _
  %s6 = ssub.s32 1, %s4
  %s7 = scalar_select 0, %s6, %s4
  $region1: #{tpu_custom_call.1} parent=0
    #allocation3 [shape = 'u8[32768]{0}', space=vmem, size = 0x8000, scoped, tag = 'input window, operand 0']
    #allocation4 [shape = 's32[2]{0}', space=sflag, size = 0x8, scoped, tag = 'scoped memory for tpu_custom_call.1']
    #allocation5 [shape = 's32[2]{0}', space=sflag, size = 0x8, scoped, tag = 'scoped memory for tpu_custom_call.1']
    #allocation6 [shape = 'u8[262144]{0}', space=vmem, size = 0x40000, scoped, tag = 'input window, operand 1']
    #allocation7 [shape = 's32[2]{0}', space=sflag, size = 0x8, scoped, tag = 'scoped memory for tpu_custom_call.1']
    #allocation8 [shape = 'u8[4096]{0}', space=vmem, size = 0x1000, scoped, tag = 'output window, operand 0, single buffered']
    %8 = vsyncpa [#allocation4], 0
    %s9 = scalar_lea.sflag [#allocation4], 1
    %10 = vsyncpa %s9, 0
    %11 = vsyncpa [#allocation7], 0
    %s12 = scalar_lea.sflag [#allocation7], 1
    %13 = vsyncpa %s12, 0
    %14 = vsyncpa [#allocation5], 0
    loop: start=0, step=1, limit=4
    $region2: #{tpu_custom_call.1} parent=1 // loop_pre_header
      _
    $region3: #{tpu_custom_call.1} parent=1 // loop_header
      %s16 = sphi 0, %s20
      %p17 = scmp.ge.s32.totalorder %s16, 4
      %s23 = sphi 0, %s35
      %s24 = sphi 0, %s31
      %s25 = sphi 0, %s23
      %s26 = sphi 0, %s24
      %s27 = sphi 0, %s25
      %s28 = sphi 0, %s26
      %s38 = sphi 0, %s40
      %s41 = sphi 0, %s38
      %s42 = sphi 0, %s41
      %s58 = sphi 0, %s42
      %s66 = sphi 0, %s68
      %s69 = sphi 0, %s66
      %s70 = sphi 0, %s69
      %s86 = sphi 0, %s70
      %s92 = sphi 0, %s94
      %s95 = sphi 0, %s92
      %s96 = sphi 0, %s95
      %s112 = sphi 0, %s96
      %s118 = sphi 0, %s120
      %s121 = sphi 0, %s118
      %s122 = sphi 0, %s121
      %s138 = sphi 0, %s122
    $region4: #{tpu_custom_call.1} parent=1 // loop_header_branch
      %19 = sbr.rel (%p17) target = $region8
    $region5: #{tpu_custom_call.1} parent=1 // loop_body
      %s21 = ssub.s32 %s16, 1
      %s22 = ssub.s32 %s16, 2
      %s29 = sadd.s32 1, %s24
      %p30 = scmp.ge.s32.totalorder %s29, 2
      %s31 = scalar_select %p30, 0, %s29
      %s32 = sadd.s32 1, %s23
      %s33 = scalar_select %p30, %s32, %s23
      %p34 = scmp.ge.s32.totalorder %s33, 1
      %s35 = scalar_select %p34, 0, %s33
      %s36 = ssub.s32 %s24, %s31
      %p37 = scmp.eq.s32.totalorder %s36, 0
      %s39 = sadd.s32 %s38, 1
      %s40 = scalar_select %p37, %s38, %s39
      %p43 = pneg %p37
      %p44 = scmp.eq.s32.totalorder %s16, 1
      %p45 = por %p43, %p44
      %p46 = scmp.ne.s32.totalorder %s38, %s41
      %p47 = scmp.eq.s32.totalorder %s16, 0
      %p48 = por %p46, %p47
      %p49 = scmp.ne.s32.totalorder %s38, %s41
      %p50 = scmp.eq.s32.totalorder %s21, 1
      %p51 = por %p49, %p50
      %p52 = scmp.ne.s32.totalorder %s41, %s42
      %p53 = scmp.eq.s32.totalorder %s21, 0
      %p54 = por %p52, %p53
      %p55 = scmp.ne.s32.totalorder %s41, %s42
      %p56 = scmp.eq.s32.totalorder %s22, 1
      %p57 = por %p55, %p56
      %p59 = scmp.ne.s32.totalorder %s42, %s58
      %p60 = scmp.eq.s32.totalorder %s22, 0
      %p61 = por %p59, %p60
      %s62 = ssub.s32 %s24, %s31
      %s63 = ssub.s32 %s23, %s35
      %s64 = sor.u32 %s62, %s63
      %p65 = scmp.eq.s32.totalorder %s64, 0
      %s67 = sadd.s32 %s66, 1
      %s68 = scalar_select %p65, %s66, %s67
      %p71 = pneg %p65
      %p72 = scmp.eq.s32.totalorder %s16, 1
      %p73 = por %p71, %p72
      %p74 = scmp.ne.s32.totalorder %s66, %s69
      %p75 = scmp.eq.s32.totalorder %s16, 0
      %p76 = por %p74, %p75
      %p77 = scmp.ne.s32.totalorder %s66, %s69
      %p78 = scmp.eq.s32.totalorder %s21, 1
      %p79 = por %p77, %p78
      %p80 = scmp.ne.s32.totalorder %s69, %s70
      %p81 = scmp.eq.s32.totalorder %s21, 0
      %p82 = por %p80, %p81
      %p83 = scmp.ne.s32.totalorder %s69, %s70
      %p84 = scmp.eq.s32.totalorder %s22, 1
      %p85 = por %p83, %p84
      %p87 = scmp.ne.s32.totalorder %s70, %s86
      %p88 = scmp.eq.s32.totalorder %s22, 0
      %p89 = por %p87, %p88
      %s90 = ssub.s32 %s23, %s35
      %p91 = scmp.eq.s32.totalorder %s90, 0
      %s93 = sadd.s32 %s92, 1
      %s94 = scalar_select %p91, %s92, %s93
      %p97 = pneg %p91
      %p98 = scmp.eq.s32.totalorder %s16, 1
      %p99 = por %p97, %p98
      %p100 = scmp.ne.s32.totalorder %s92, %s95
      %p101 = scmp.eq.s32.totalorder %s16, 0
      %p102 = por %p100, %p101
      %p103 = scmp.ne.s32.totalorder %s92, %s95
      %p104 = scmp.eq.s32.totalorder %s21, 1
      %p105 = por %p103, %p104
      %p106 = scmp.ne.s32.totalorder %s95, %s96
      %p107 = scmp.eq.s32.totalorder %s21, 0
      %p108 = por %p106, %p107
      %p109 = scmp.ne.s32.totalorder %s95, %s96
      %p110 = scmp.eq.s32.totalorder %s22, 1
      %p111 = por %p109, %p110
      %p113 = scmp.ne.s32.totalorder %s96, %s112
      %p114 = scmp.eq.s32.totalorder %s22, 0
      %p115 = por %p113, %p114
      %s116 = ssub.s32 %s23, %s35
      %p117 = scmp.eq.s32.totalorder %s116, 0
      %s119 = sadd.s32 %s118, 1
      %s120 = scalar_select %p117, %s118, %s119
      %p123 = pneg %p117
      %p124 = scmp.eq.s32.totalorder %s16, 1
      %p125 = por %p123, %p124
      %p126 = scmp.ne.s32.totalorder %s118, %s121
      %p127 = scmp.eq.s32.totalorder %s16, 0
      %p128 = por %p126, %p127
      %p129 = scmp.ne.s32.totalorder %s118, %s121
      %p130 = scmp.eq.s32.totalorder %s21, 1
      %p131 = por %p129, %p130
      %p132 = scmp.ne.s32.totalorder %s121, %s122
      %p133 = scmp.eq.s32.totalorder %s21, 0
      %p134 = por %p132, %p133
      %p135 = scmp.ne.s32.totalorder %s121, %s122
      %p136 = scmp.eq.s32.totalorder %s22, 1
      %p137 = por %p135, %p136
      %p139 = scmp.ne.s32.totalorder %s122, %s138
      %p140 = scmp.eq.s32.totalorder %s22, 0
      %p141 = por %p139, %p140
      %p142 = scmp.le.s32.totalorder 1, %s16
      %p143 = scmp.lt.s32.totalorder %s16, 3
      %p144 = pnand %p142, %p143
      %p145 = pneg %p144
      // Predicated region
      $region9: #{tpu_custom_call.1} parent=5 // pred_check
        _
      $region10: #{tpu_custom_call.1} parent=5 // pred_check_branch
        %147 = sbr.rel (%p144) target = $region12
      $region11: #{tpu_custom_call.1} parent=5 // pred_region
        %s148 = ssub.s32 %s16, 1
        // Predicated region
        $region13: #{tpu_custom_call.1} parent=11 // pred_check
          %p149 = pneg %p108
        $region14: #{tpu_custom_call.1} parent=11 // pred_check_branch
          %151 = sbr.rel (%p149) target = $region16
        $region15: #{tpu_custom_call.1} parent=11 // pred_region
          %p152 = scmp.lt.s32.totalorder %s25, 0
          %s153 = scalar_select %p152, %s25, 0
          %s154 = scalar_lea.vmem %s2, %s153
        $region16: #{tpu_custom_call.1} parent=11 // pred_fallthru
          _
      $region12: #{tpu_custom_call.1} parent=5 // pred_fallthru
        _
      %p155 = scmp.lt.s32.totalorder %s16, 2
      // Predicated region
      $region17: #{tpu_custom_call.1} parent=5 // pred_check
        %p156 = pneg %p155
      $region18: #{tpu_custom_call.1} parent=5 // pred_check_branch
        %158 = sbr.rel (%p156) target = $region20
      $region19: #{tpu_custom_call.1} parent=5 // pred_region
        // Predicated region
        $region21: #{tpu_custom_call.1} parent=19 // pred_check
          %p159 = pneg %p48
        $region22: #{tpu_custom_call.1} parent=19 // pred_check_branch
          %161 = sbr.rel (%p159) target = $region24
        $region23: #{tpu_custom_call.1} parent=19 // pred_region
          %s162 = sand.u32 %s38, 1
          %s163 = scalar_lea.sflag [#allocation4], %s162
          %s164 = sand.u32 %s38, 1
          %s165 = smul.addr %s164, 32
          %s166 = scalar_lea.vmem [#allocation3], %s165
          %s167 = smul.u32 4, %s24
          %169 = vsyncadd %s163, 0
          %s170 = smul.addr %s167, 8
          %s171 = scalar_lea.hbm %s0, %s170
          %s173 = sshll.u32 %s171, 4
          %s174 = int_to_ptr.hbm [resolvable:$true] %s173
          %s175 = sshll.u32 %s166, 4
          %s176 = int_to_ptr.vmem [resolvable:$true] %s175
          %178 = dma.hbm_to_vmem [thread:$0]  %s174, 512, %s176, %s163
        $region24: #{tpu_custom_call.1} parent=19 // pred_fallthru
          _
        // Predicated region
        $region25: #{tpu_custom_call.1} parent=19 // pred_check
          %p179 = pneg %p76
        $region26: #{tpu_custom_call.1} parent=19 // pred_check_branch
          %181 = sbr.rel (%p179) target = $region28
        $region27: #{tpu_custom_call.1} parent=19 // pred_region
          %s182 = sand.u32 %s66, 1
          %s183 = scalar_lea.sflag [#allocation7], %s182
          %s184 = sand.u32 %s66, 1
          %s185 = smul.addr %s184, 256
          %s186 = scalar_lea.vmem [#allocation6], %s185
          %s187 = smul.u32 64, %s24
          %189 = vsyncadd %s183, 0
          %s190 = sadd.s32 %s23, %s187
          %s191 = smul.addr %s190, 4
          %s192 = scalar_lea.hbm %s1, %s191
          %s193 = sshll.u32 %s192, 4
          %s194 = int_to_ptr.hbm [resolvable:$true] %s193
          %s195 = sshll.u32 %s186, 4
          %s196 = int_to_ptr.vmem [resolvable:$true] %s195
          %201 = dma.hbm_to_vmem [thread:$0]  %s194, 4096, %s196, %s183, 64, 64, 4
        $region28: #{tpu_custom_call.1} parent=19 // pred_fallthru
          _
      $region20: #{tpu_custom_call.1} parent=5 // pred_fallthru
        _
      %p202 = scmp.le.s32.totalorder 1, %s16
      %p203 = scmp.lt.s32.totalorder %s16, 3
      %p204 = pnand %p202, %p203
      %p205 = pneg %p204
      // Predicated region
      $region29: #{tpu_custom_call.1} parent=5 // pred_check
        _
      $region30: #{tpu_custom_call.1} parent=5 // pred_check_branch
        %207 = sbr.rel (%p204) target = $region32
      $region31: #{tpu_custom_call.1} parent=5 // pred_region
        %s208 = ssub.s32 %s16, 1
        %s209 = sand.u32 %s41, 1
        %s210 = scalar_lea.sflag [#allocation4], %s209
        %s211 = sand.u32 %s41, 1
        %s212 = smul.addr %s211, 32
        %s213 = scalar_lea.vmem [#allocation3], %s212
        // Predicated region
        $region33: #{tpu_custom_call.1} parent=31 // pred_check
          %p214 = pneg %p54
        $region34: #{tpu_custom_call.1} parent=31 // pred_check_branch
          %216 = sbr.rel (%p214) target = $region36
        $region35: #{tpu_custom_call.1} parent=31 // pred_region
          %218 = dma.done %s210, 512
        $region36: #{tpu_custom_call.1} parent=31 // pred_fallthru
          _
        %s219 = sand.u32 %s69, 1
        %s220 = scalar_lea.sflag [#allocation7], %s219
        %s221 = sand.u32 %s69, 1
        %s222 = smul.addr %s221, 256
        %s223 = scalar_lea.vmem [#allocation6], %s222
        // Predicated region
        $region37: #{tpu_custom_call.1} parent=31 // pred_check
          %p224 = pneg %p82
        $region38: #{tpu_custom_call.1} parent=31 // pred_check_branch
          %226 = sbr.rel (%p224) target = $region40
        $region39: #{tpu_custom_call.1} parent=31 // pred_region
          %228 = dma.done %s220, 4096
        $region40: #{tpu_custom_call.1} parent=31 // pred_fallthru
          _
        %s229 = sand.u32 %s41, 1
        %s230 = scalar_lea.sflag [#allocation4], %s229
        %s231 = sand.u32 %s41, 1
        %s232 = smul.addr %s231, 32
        %s233 = scalar_lea.vmem [#allocation3], %s232
        %p234 = pneg %p54
        %p235 = pneg %p51
        %s236 = sand.u32 %s69, 1
        %s237 = scalar_lea.sflag [#allocation7], %s236
        %s238 = sand.u32 %s69, 1
        %s239 = smul.addr %s238, 256
        %s240 = scalar_lea.vmem [#allocation6], %s239
        %p241 = pneg %p82
        %p242 = pneg %p79
        %p243 = scmp.lt.s32.totalorder %s25, 0
        %s244 = scalar_select %p243, %s25, 0
        %s245 = scalar_lea.vmem %s2, %s244
        %p246 = pneg %p108
        %p247 = pneg %p105
        %p248 = pneg %p134
        %p249 = pneg %p131
        %s250 = smul.u32 4, %s26
        %s251 = smul.u32 64, %s26
        %p252 = scmp.lt.s32.totalorder %s25, 0
        %s253 = scalar_select %p252, %s25, 0
        %s254 = scalar_lea.vmem %s2, %s253
        %p255 = scmp.eq.s32.totalorder %s26, 0
        // Predicated region
        $region41: #{tpu_custom_call.1} parent=31 // pred_check
          %p256 = pneg %p255
        $region42: #{tpu_custom_call.1} parent=31 // pred_check_branch
          %258 = sbr.rel (%p256) target = $region44
        $region43: #{tpu_custom_call.1} parent=31 // pred_region
          %259 = vst [vmem:[#allocation2] sm:$0xff] 0.0
        $region44: #{tpu_custom_call.1} parent=31 // pred_fallthru
          _
        %v260 = vld [vmem:[#allocation2] sm:$0xff]
        %v261 = vld [vmem:[%s213] sm:$0xff]
        %v262 = vld [vmem:[%s213 + $0x8] sm:$0xff]
        %v263 = vld [vmem:[%s213 + $0x10] sm:$0xff]
        %v264 = vld [vmem:[%s213 + $0x18] sm:$0xff]
        %v265 = vpack.c.bf16 %v261, %v261
        %v266 = vpack.c.bf16 %v262, %v262
        %v267 = vpack.c.bf16 %v263, %v263
        %v268 = vpack.c.bf16 %v264, %v264
        %v269 = vld [vmem:[%s223] sm:$0xf]
        %v270 = vld [vmem:[%s223 + $0x4] sm:$0xf]
        %v271 = vld [vmem:[%s223 + $0x8] sm:$0xf]
        %v272 = vld [vmem:[%s223 + $0xc] sm:$0xf]
        %v273 = vld [vmem:[%s223 + $0x10] sm:$0xf]
        %v274 = vld [vmem:[%s223 + $0x14] sm:$0xf]
        %v275 = vld [vmem:[%s223 + $0x18] sm:$0xf]
        %v276 = vld [vmem:[%s223 + $0x1c] sm:$0xf]
        %v277 = vld [vmem:[%s223 + $0x20] sm:$0xf]
        %v278 = vld [vmem:[%s223 + $0x24] sm:$0xf]
        %v279 = vld [vmem:[%s223 + $0x28] sm:$0xf]
        %v280 = vld [vmem:[%s223 + $0x2c] sm:$0xf]
        %v281 = vld [vmem:[%s223 + $0x30] sm:$0xf]
        %v282 = vld [vmem:[%s223 + $0x34] sm:$0xf]
        %v283 = vld [vmem:[%s223 + $0x38] sm:$0xf]
        %v284 = vld [vmem:[%s223 + $0x3c] sm:$0xf]
        %v285 = vld [vmem:[%s223 + $0x40] sm:$0xf]
        %v286 = vld [vmem:[%s223 + $0x44] sm:$0xf]
        %v287 = vld [vmem:[%s223 + $0x48] sm:$0xf]
        %v288 = vld [vmem:[%s223 + $0x4c] sm:$0xf]
        %v289 = vld [vmem:[%s223 + $0x50] sm:$0xf]
        %v290 = vld [vmem:[%s223 + $0x54] sm:$0xf]
        %v291 = vld [vmem:[%s223 + $0x58] sm:$0xf]
        %v292 = vld [vmem:[%s223 + $0x5c] sm:$0xf]
        %v293 = vld [vmem:[%s223 + $0x60] sm:$0xf]
        %v294 = vld [vmem:[%s223 + $0x64] sm:$0xf]
        %v295 = vld [vmem:[%s223 + $0x68] sm:$0xf]
        %v296 = vld [vmem:[%s223 + $0x6c] sm:$0xf]
        %v297 = vld [vmem:[%s223 + $0x70] sm:$0xf]
        %v298 = vld [vmem:[%s223 + $0x74] sm:$0xf]
        %v299 = vld [vmem:[%s223 + $0x78] sm:$0xf]
        %v300 = vld [vmem:[%s223 + $0x7c] sm:$0xf]
        %v301 = vld [vmem:[%s223 + $0x80] sm:$0xf]
        %v302 = vld [vmem:[%s223 + $0x84] sm:$0xf]
        %v303 = vld [vmem:[%s223 + $0x88] sm:$0xf]
        %v304 = vld [vmem:[%s223 + $0x8c] sm:$0xf]
        %v305 = vld [vmem:[%s223 + $0x90] sm:$0xf]
        %v306 = vld [vmem:[%s223 + $0x94] sm:$0xf]
        %v307 = vld [vmem:[%s223 + $0x98] sm:$0xf]
        %v308 = vld [vmem:[%s223 + $0x9c] sm:$0xf]
        %v309 = vld [vmem:[%s223 + $0xa0] sm:$0xf]
        %v310 = vld [vmem:[%s223 + $0xa4] sm:$0xf]
        %v311 = vld [vmem:[%s223 + $0xa8] sm:$0xf]
        %v312 = vld [vmem:[%s223 + $0xac] sm:$0xf]
        %v313 = vld [vmem:[%s223 + $0xb0] sm:$0xf]
        %v314 = vld [vmem:[%s223 + $0xb4] sm:$0xf]
        %v315 = vld [vmem:[%s223 + $0xb8] sm:$0xf]
        %v316 = vld [vmem:[%s223 + $0xbc] sm:$0xf]
        %v317 = vld [vmem:[%s223 + $0xc0] sm:$0xf]
        %v318 = vld [vmem:[%s223 + $0xc4] sm:$0xf]
        %v319 = vld [vmem:[%s223 + $0xc8] sm:$0xf]
        %v320 = vld [vmem:[%s223 + $0xcc] sm:$0xf]
        %v321 = vld [vmem:[%s223 + $0xd0] sm:$0xf]
        %v322 = vld [vmem:[%s223 + $0xd4] sm:$0xf]
        %v323 = vld [vmem:[%s223 + $0xd8] sm:$0xf]
        %v324 = vld [vmem:[%s223 + $0xdc] sm:$0xf]
        %v325 = vld [vmem:[%s223 + $0xe0] sm:$0xf]
        %v326 = vld [vmem:[%s223 + $0xe4] sm:$0xf]
        %v327 = vld [vmem:[%s223 + $0xe8] sm:$0xf]
        %v328 = vld [vmem:[%s223 + $0xec] sm:$0xf]
        %v329 = vld [vmem:[%s223 + $0xf0] sm:$0xf]
        %v330 = vld [vmem:[%s223 + $0xf4] sm:$0xf]
        %v331 = vld [vmem:[%s223 + $0xf8] sm:$0xf]
        %v332 = vld [vmem:[%s223 + $0xfc] sm:$0xf]
        %v397 = vunpack.c.l.b16 %v269
        %v398 = vunpack.c.l.b16 %v270
        %v399 = vunpack.c.l.b16 %v271
        %v400 = vunpack.c.l.b16 %v272
        %v401 = vunpack.c.l.b16 %v273
        %v402 = vunpack.c.l.b16 %v274
        %v403 = vunpack.c.l.b16 %v275
        %v404 = vunpack.c.l.b16 %v276
        %v405 = vunpack.c.l.b16 %v277
        %v406 = vunpack.c.l.b16 %v278
        %v407 = vunpack.c.l.b16 %v279
        %v408 = vunpack.c.l.b16 %v280
        %v409 = vunpack.c.l.b16 %v281
        %v410 = vunpack.c.l.b16 %v282
        %v411 = vunpack.c.l.b16 %v283
        %v412 = vunpack.c.l.b16 %v284
        %v413 = vunpack.c.l.b16 %v285
        %v414 = vunpack.c.l.b16 %v286
        %v415 = vunpack.c.l.b16 %v287
        %v416 = vunpack.c.l.b16 %v288
        %v417 = vunpack.c.l.b16 %v289
        %v418 = vunpack.c.l.b16 %v290
        %v419 = vunpack.c.l.b16 %v291
        %v420 = vunpack.c.l.b16 %v292
        %v421 = vunpack.c.l.b16 %v293
        %v422 = vunpack.c.l.b16 %v294
        %v423 = vunpack.c.l.b16 %v295
        %v424 = vunpack.c.l.b16 %v296
        %v425 = vunpack.c.l.b16 %v297
        %v426 = vunpack.c.l.b16 %v298
        %v427 = vunpack.c.l.b16 %v299
        %v428 = vunpack.c.l.b16 %v300
        %v429 = vunpack.c.l.b16 %v301
        %v430 = vunpack.c.l.b16 %v302
        %v431 = vunpack.c.l.b16 %v303
        %v432 = vunpack.c.l.b16 %v304
        %v433 = vunpack.c.l.b16 %v305
        %v434 = vunpack.c.l.b16 %v306
        %v435 = vunpack.c.l.b16 %v307
        %v436 = vunpack.c.l.b16 %v308
        %v437 = vunpack.c.l.b16 %v309
        %v438 = vunpack.c.l.b16 %v310
        %v439 = vunpack.c.l.b16 %v311
        %v440 = vunpack.c.l.b16 %v312
        %v441 = vunpack.c.l.b16 %v313
        %v442 = vunpack.c.l.b16 %v314
        %v443 = vunpack.c.l.b16 %v315
        %v444 = vunpack.c.l.b16 %v316
        %v445 = vunpack.c.l.b16 %v317
        %v446 = vunpack.c.l.b16 %v318
        %v447 = vunpack.c.l.b16 %v319
        %v448 = vunpack.c.l.b16 %v320
        %v449 = vunpack.c.l.b16 %v321
        %v450 = vunpack.c.l.b16 %v322
        %v451 = vunpack.c.l.b16 %v323
        %v452 = vunpack.c.l.b16 %v324
        %v453 = vunpack.c.l.b16 %v325
        %v454 = vunpack.c.l.b16 %v326
        %v455 = vunpack.c.l.b16 %v327
        %v456 = vunpack.c.l.b16 %v328
        %v457 = vunpack.c.l.b16 %v329
        %v458 = vunpack.c.l.b16 %v330
        %v459 = vunpack.c.l.b16 %v331
        %v460 = vunpack.c.l.b16 %v332
        %v461 = vpack.c.b16 %v398, %v397
        %v462 = vpack.c.b16 %v400, %v399
        %v463 = vpack.c.b16 %v402, %v401
        %v464 = vpack.c.b16 %v404, %v403
        %v465 = vpack.c.b16 %v406, %v405
        %v466 = vpack.c.b16 %v408, %v407
        %v467 = vpack.c.b16 %v410, %v409
        %v468 = vpack.c.b16 %v412, %v411
        %v469 = vpack.c.b16 %v414, %v413
        %v470 = vpack.c.b16 %v416, %v415
        %v471 = vpack.c.b16 %v418, %v417
        %v472 = vpack.c.b16 %v420, %v419
        %v473 = vpack.c.b16 %v422, %v421
        %v474 = vpack.c.b16 %v424, %v423
        %v475 = vpack.c.b16 %v426, %v425
        %v476 = vpack.c.b16 %v428, %v427
        %v477 = vpack.c.b16 %v430, %v429
        %v478 = vpack.c.b16 %v432, %v431
        %v479 = vpack.c.b16 %v434, %v433
        %v480 = vpack.c.b16 %v436, %v435
        %v481 = vpack.c.b16 %v438, %v437
        %v482 = vpack.c.b16 %v440, %v439
        %v483 = vpack.c.b16 %v442, %v441
        %v484 = vpack.c.b16 %v444, %v443
        %v485 = vpack.c.b16 %v446, %v445
        %v486 = vpack.c.b16 %v448, %v447
        %v487 = vpack.c.b16 %v450, %v449
        %v488 = vpack.c.b16 %v452, %v451
        %v489 = vpack.c.b16 %v454, %v453
        %v490 = vpack.c.b16 %v456, %v455
        %v491 = vpack.c.b16 %v458, %v457
        %v492 = vpack.c.b16 %v460, %v459
        %525 = vmatpush.bf16.msra.mxu0 %v468
        %526 = vmatpush.bf16.msra.mxu0 %v467
        %527 = vmatpush.bf16.msra.mxu0 %v466
        %528 = vmatpush.bf16.msra.mxu0 %v465
        %529 = vmatpush.bf16.msra.mxu0 %v464
        %530 = vmatpush.bf16.msra.mxu0 %v463
        %531 = vmatpush.bf16.msra.mxu0 %v462
        %532 = vmatpush.bf16.msra.mxu0 %v461
        %533 = vmatmul.bf16.gmra.mxu0 %v265
        %v534 = vpop.f32.mrf.mxu0
        %v535 = vadd.f32 0.0, %v534
        %v536 = vpop.f32.mrf.mxu0
        %537 = vdwg.mxu0
        %538 = vmatpush.bf16.msra.mxu0 %v476
        %539 = vmatpush.bf16.msra.mxu0 %v475
        %540 = vmatpush.bf16.msra.mxu0 %v474
        %541 = vmatpush.bf16.msra.mxu0 %v473
        %542 = vmatpush.bf16.msra.mxu0 %v472
        %543 = vmatpush.bf16.msra.mxu0 %v471
        %544 = vmatpush.bf16.msra.mxu0 %v470
        %545 = vmatpush.bf16.msra.mxu0 %v469
        %546 = vmatmul.bf16.gmra.mxu0 %v266
        %v547 = vpop.f32.mrf.mxu0
        %v548 = vadd.f32 %v535, %v547
        %v549 = vpop.f32.mrf.mxu0
        %550 = vdwg.mxu0
        %551 = vmatpush.bf16.msra.mxu0 %v484
        %552 = vmatpush.bf16.msra.mxu0 %v483
        %553 = vmatpush.bf16.msra.mxu0 %v482
        %554 = vmatpush.bf16.msra.mxu0 %v481
        %555 = vmatpush.bf16.msra.mxu0 %v480
        %556 = vmatpush.bf16.msra.mxu0 %v479
        %557 = vmatpush.bf16.msra.mxu0 %v478
        %558 = vmatpush.bf16.msra.mxu0 %v477
        %559 = vmatmul.bf16.gmra.mxu0 %v267
        %v560 = vpop.f32.mrf.mxu0
        %v561 = vadd.f32 %v548, %v560
        %v562 = vpop.f32.mrf.mxu0
        %563 = vdwg.mxu0
        %564 = vmatpush.bf16.msra.mxu0 %v492
        %565 = vmatpush.bf16.msra.mxu0 %v491
        %566 = vmatpush.bf16.msra.mxu0 %v490
        %567 = vmatpush.bf16.msra.mxu0 %v489
        %568 = vmatpush.bf16.msra.mxu0 %v488
        %569 = vmatpush.bf16.msra.mxu0 %v487
        %570 = vmatpush.bf16.msra.mxu0 %v486
        %571 = vmatpush.bf16.msra.mxu0 %v485
        %572 = vmatmul.bf16.gmra.mxu0 %v268
        %v573 = vpop.f32.mrf.mxu0
        %v574 = vadd.f32 %v561, %v573
        %v575 = vpop.f32.mrf.mxu0
        %576 = vdwg.mxu0
        %v577 = vadd.f32 %v260, %v574
        %578 = vst [vmem:[#allocation2] sm:$0xff] %v577
        %p579 = scmp.eq.s32.totalorder %s26, 1
        // Predicated region
        $region45: #{tpu_custom_call.1} parent=31 // pred_check
          %p580 = pneg %p579
        $region46: #{tpu_custom_call.1} parent=31 // pred_check_branch
          %582 = sbr.rel (%p580) target = $region48
        $region47: #{tpu_custom_call.1} parent=31 // pred_region
          %v583 = vld [vmem:[#allocation2] sm:$0xff]
          %v584 = vld [vmem:[%s254] sm:$0x1]
          %v586 = vperm.slane %v584, 0
          %v588 = vadd.f32 %v583, %v586
          %589 = vst [vmem:[#allocation8] sm:$0xff] %v588
        $region48: #{tpu_custom_call.1} parent=31 // pred_fallthru
          _
        // Predicated region
        $region49: #{tpu_custom_call.1} parent=31 // pred_check
          %p590 = pneg %p131
        $region50: #{tpu_custom_call.1} parent=31 // pred_check_branch
          %592 = sbr.rel (%p590) target = $region52
        $region51: #{tpu_custom_call.1} parent=31 // pred_region
          %594 = vsyncadd [#allocation5], 0
          %s595 = smul.addr %s25, 8
          %s596 = scalar_lea.hbm %s3, %s595
          %s598 = sshll.u32 [#allocation8], 4
          %s599 = int_to_ptr.vmem [resolvable:$true] %s598
          %s600 = sshll.u32 %s596, 4
          %s601 = int_to_ptr.hbm [resolvable:$true] %s600
          %603 = dma.vmem_to_hbm [thread:$0]  %s599, 128, %s601, [#allocation5]
        $region52: #{tpu_custom_call.1} parent=31 // pred_fallthru
          _
        // Predicated region
        $region53: #{tpu_custom_call.1} parent=31 // pred_check
          %p604 = pneg %p131
        $region54: #{tpu_custom_call.1} parent=31 // pred_check_branch
          %606 = sbr.rel (%p604) target = $region56
        $region55: #{tpu_custom_call.1} parent=31 // pred_region
          %608 = dma.done [#allocation5], 128
        $region56: #{tpu_custom_call.1} parent=31 // pred_fallthru
          _
      $region32: #{tpu_custom_call.1} parent=5 // pred_fallthru
        _
      %p609 = scmp.le.s32.totalorder 2, %s16
      // Predicated region
      $region57: #{tpu_custom_call.1} parent=5 // pred_check
        %p610 = pneg %p609
      $region58: #{tpu_custom_call.1} parent=5 // pred_check_branch
        %612 = sbr.rel (%p610) target = $region60
      $region59: #{tpu_custom_call.1} parent=5 // pred_region
        %s613 = ssub.s32 %s16, 2
      $region60: #{tpu_custom_call.1} parent=5 // pred_fallthru
        _
    $region6: #{tpu_custom_call.1} parent=1 // loop_footer
      %s20 = sadd.s32 1, %s16
    $region7: #{tpu_custom_call.1} parent=1 // loop_footer_branch
      %15 = sbr.rel target = $region3
    $region8: #{tpu_custom_call.1} parent=1 // loop_exit
      _
    %614 = vsyncpa [#allocation4], 1
    %s615 = scalar_lea.sflag [#allocation4], 1
    %616 = vsyncpa %s615, 1
    %617 = vsyncpa [#allocation7], 1
    %s618 = scalar_lea.sflag [#allocation7], 1
    %619 = vsyncpa %s618, 1
    %620 = vsyncpa [#allocation5], 1
    %s621 = scalar_lea.sflag [#allocation5], 1
    %622 = vsyncpa %s621, 1

</llo_original>
